<compile_context>
chip_gen: v6e
topology: v6e:2x2x1
jax: 0.10.0
libtpu: 0.0.40
codegen_flags: <defaults>
</compile_context>

<pallas_src>
import functools

import jax
import jax.numpy as jnp
from jax.experimental import pallas as pl
from jax.experimental.pallas import tpu as pltpu

_MIB = 1024 * 1024


def _round_up(x: int, m: int) -> int:
    return (x + m - 1) // m * m


def _fit_tf(tf_max: int, d_ff_p: int) -> int:
    """Largest multiple of 128 that is <= tf_max and divides d_ff_p (>=128)."""
    cand = max(128, (min(tf_max, d_ff_p) // 128) * 128)
    while cand > 128 and d_ff_p % cand:
        cand -= 128
    return cand


def _select_config():
    """Per-generation tile sizes + per-call VMEM budget (static Python ints)."""
    try:
        info = pltpu.get_tpu_info()
        vmem_cap = int(getattr(info, "vmem_capacity_bytes", 64 * _MIB))
    except Exception:  # not resolvable -> conservative (v7x-like) defaults
        vmem_cap = 64 * _MIB
    if vmem_cap <= 64 * _MIB:
        # v7x-like: 64 MiB per TensorCore, 2 TCs.  Leave headroom for compiler
        # internal scratch and make sure the parallel row axis has >= 2 tiles.
        return dict(tile_rows=512, tile_ff=512,
                    vmem_budget=min(vmem_cap, 52 * _MIB), min_row_tiles=2)
    # v5e / v6e: 128 MiB VMEM, single TensorCore.  Big row tiles amortize the
    # per-row-tile weight re-streaming; big d_ff chunks cut accumulator
    # read-modify-write passes and grid overhead.
    return dict(tile_rows=1024, tile_ff=1024,
                vmem_budget=min(vmem_cap - 24 * _MIB, 104 * _MIB),
                min_row_tiles=1)


def _vmem_footprint(tm, tf, d_model_p, a_bytes, w_bytes, use_scratch):
    est = 2 * tm * d_model_p * a_bytes                   # x tile (double buffered)
    est += 2 * tm * d_model_p * a_bytes                  # output tile
    est += 2 * (d_model_p * tf + tf) * w_bytes           # W1 chunk + b1
    est += 2 * (tf * d_model_p + d_model_p) * w_bytes    # W2 chunk + b2
    est += tm * tf * 4                                   # relu(h) intermediate (f32)
    if use_scratch:
        est += tm * d_model_p * 4                        # f32 accumulator scratch
    return est + 2 * _MIB                                # slack


# ------------------------------- kernels ------------------------------------

def ffn_kernel_scratch(x_ref, w1_ref, b1_ref, w2_ref, b2_ref, o_ref, acc_ref):
    """Non-f32 output (e.g. bf16): f32 VMEM accumulator, cast on last chunk."""
    f = pl.program_id(1)

    @pl.when(f == 0)
    def _():
        # Fold the second bias into the accumulator init.
        acc_ref[...] = jnp.broadcast_to(
            b2_ref[...].astype(jnp.float32), acc_ref.shape)

    # h_chunk = relu(x @ W1[:, chunk] + b1[chunk])   (f32 accumulate on MXU)
    h = jnp.dot(x_ref[...], w1_ref[...], preferred_element_type=jnp.float32)
    h = jnp.maximum(h + b1_ref[...].astype(jnp.float32), 0.0)
    # TODO(synk): dropout omitted (eval-mode identity); training would need a
    # Bernoulli mask via pltpu.prng_seed + pltpu.prng_random_bits here.

    acc_ref[...] += jnp.dot(h.astype(w2_ref.dtype), w2_ref[...],
                            preferred_element_type=jnp.float32)

    @pl.when(f == pl.num_programs(1) - 1)
    def _():
        o_ref[...] = acc_ref[...].astype(o_ref.dtype)


def ffn_kernel_f32(x_ref, w1_ref, b1_ref, w2_ref, b2_ref, o_ref):
    """f32 output: the resident output block IS the accumulator (no scratch,
    no epilogue copy pass)."""
    f = pl.program_id(1)

    @pl.when(f == 0)
    def _():
        o_ref[...] = jnp.broadcast_to(
            b2_ref[...].astype(jnp.float32), o_ref.shape)

    h = jnp.dot(x_ref[...], w1_ref[...], preferred_element_type=jnp.float32)
    h = jnp.maximum(h + b1_ref[...].astype(jnp.float32), 0.0)
    o_ref[...] += jnp.dot(h.astype(w2_ref.dtype), w2_ref[...],
                          preferred_element_type=jnp.float32)


# ------------------------------ forward -------------------------------------

@functools.partial(jax.jit, static_argnames=(
    "tile_rows", "tile_ff", "vmem_budget", "min_row_tiles"))
def _ffn_forward(x, w1_p, b1_p, w2_p, b2_p, *,
                 tile_rows, tile_ff, vmem_budget, min_row_tiles):
    batch, seq, d_model = x.shape
    rows = batch * seq
    d_model_p, d_ff_p = w1_p.shape
    out_dtype = x.dtype
    use_scratch = out_dtype != jnp.float32

    a_bytes = jnp.dtype(x.dtype).itemsize
    w_bytes = jnp.dtype(w1_p.dtype).itemsize

    # ---- tiling ------------------------------------------------------------
    row_align = max(8, 32 // a_bytes)          # 8 for f32, 16 for bf16
    tm = min(_round_up(tile_rows, row_align), _round_up(rows, row_align))
    # Give the "parallel" row axis >= min_row_tiles tiles (v7x: 2 TensorCores).
    if min_row_tiles > 1 and rows >= min_row_tiles * row_align:
        tm = min(tm, _round_up(pl.cdiv(rows, min_row_tiles), row_align))

    tf = _fit_tf(tile_ff, d_ff_p)

    # Shrink tf first (keeps the large row tile -> weight re-streaming stays
    # amortized), then tm, until the double-buffered working set fits.
    while _vmem_footprint(tm, tf, d_model_p, a_bytes, w_bytes,
                          use_scratch) > vmem_budget:
        if tf > 128:
            tf = _fit_tf(tf // 2, d_ff_p)
        elif tm > row_align:
            tm = max(row_align, _round_up(tm // 2, row_align))
        else:
            break

    rows_p = _round_up(rows, tm)
    grid = (rows_p // tm, d_ff_p // tf)
    num_row_tiles = rows_p // tm

    # ---- pad only the activations per call (weights pre-padded at init) -----
    x2d = x.reshape(rows, d_model)
    x_p = jnp.pad(x2d, ((0, rows_p - rows), (0, d_model_p - d_model)))

    # ---- advisory cost estimate: weights are read once per row tile ---------
    weight_bytes = (w1_p.size + w2_p.size + b1_p.size + b2_p.size) * w_bytes
    cost = pl.CostEstimate(
        flops=4 * rows_p * d_model_p * d_ff_p,
        transcendentals=0,
        bytes_accessed=int(2 * rows_p * d_model_p * a_bytes
                           + num_row_tiles * weight_bytes),
    )

    in_specs = [
        pl.BlockSpec((tm, d_model_p), lambda i, f: (i, 0)),    # x rows (resident over f)
        pl.BlockSpec((d_model_p, tf), lambda i, f: (0, f)),    # W1 chunk
        pl.BlockSpec((1, tf), lambda i, f: (0, f)),            # b1 chunk
        pl.BlockSpec((tf, d_model_p), lambda i, f: (f, 0)),    # W2 chunk
        pl.BlockSpec((1, d_model_p), lambda i, f: (0, 0)),     # b2
    ]
    out_spec = pl.BlockSpec((tm, d_model_p), lambda i, f: (i, 0))

    kernel = ffn_kernel_scratch if use_scratch else ffn_kernel_f32
    scratch = ([pltpu.VMEM((tm, d_model_p), jnp.float32)]
               if use_scratch else [])

    out_p = pl.pallas_call(
        kernel,
        out_shape=jax.ShapeDtypeStruct((rows_p, d_model_p), out_dtype),
        grid_spec=pltpu.PrefetchScalarGridSpec(
            num_scalar_prefetch=0,
            grid=grid,
            in_specs=in_specs,
            out_specs=out_spec,
            scratch_shapes=scratch,
        ),
        compiler_params=pltpu.CompilerParams(
            dimension_semantics=("parallel", "arbitrary"),
            vmem_limit_bytes=int(vmem_budget),
        ),
        cost_estimate=cost,
    )(x_p, w1_p, b1_p, w2_p, b2_p)

    return out_p[:rows, :d_model].reshape(batch, seq, d_model)


class PositionwiseFeedForwardTPU:
    """y = w2(relu(w1(x))) + biases; dropout is eval-mode identity.

    Weights are stored (in, out) — i.e. pass torch nn.Linear.weight.T.
    Weight padding to lane-aligned (128-multiple) shapes happens ONCE here,
    not per forward call.
    """

    def __init__(self, w1, b1, w2, b2):
        self._cfg = _select_config()
        d_model, d_ff = w1.shape
        d_model_p = _round_up(d_model, 128)
        d_ff_128 = _round_up(d_ff, 128)
        tf = _fit_tf(self._cfg["tile_ff"], _round_up(d_ff_128, 128))
        tf = min(tf, d_ff_128)
        d_ff_p = _round_up(d_ff_128, tf)
        # Zero padding is exact: padded W1 cols / b1 / W2 rows / b2 are zero.
        self.w1_p = jnp.pad(w1, ((0, d_model_p - d_model), (0, d_ff_p - d_ff)))
        self.b1_p = jnp.pad(b1, (0, d_ff_p - d_ff)).reshape(1, d_ff_p)
        self.w2_p = jnp.pad(w2, ((0, d_ff_p - d_ff), (0, d_model_p - d_model)))
        self.b2_p = jnp.pad(b2, (0, d_model_p - d_model)).reshape(1, d_model_p)

    def __call__(self, x):
        cfg = self._cfg
        return _ffn_forward(
            x, self.w1_p, self.b1_p, self.w2_p, self.b2_p,
            tile_rows=cfg["tile_rows"], tile_ff=cfg["tile_ff"],
            vmem_budget=cfg["vmem_budget"],
            min_row_tiles=cfg["min_row_tiles"])


if __name__ == "__main__":
    # Small deterministic example consistent with the module's forward.
    batch, seq, d_model, d_ff = 2, 8, 32, 64

    key = jax.random.PRNGKey(0)
    kx, kw1, kb1, kw2, kb2 = jax.random.split(key, 5)

    x = jax.random.normal(kx, (batch, seq, d_model), dtype=jnp.float32)
    # nn.Linear stores weight as (out, in); this kernel expects (in, out).
    w1 = jax.random.normal(kw1, (d_model, d_ff), dtype=jnp.float32) * 0.1
    b1 = jax.random.normal(kb1, (d_ff,), dtype=jnp.float32) * 0.1
    w2 = jax.random.normal(kw2, (d_ff, d_model), dtype=jnp.float32) * 0.1
    b2 = jax.random.normal(kb2, (d_model,), dtype=jnp.float32) * 0.1

    ffn = PositionwiseFeedForwardTPU(w1, b1, w2, b2)
    out = jax.block_until_ready(ffn(x))

    # Pure-JAX reference (eval-mode: dropout is identity).
    ref = jnp.maximum(x @ w1 + b1, 0.0) @ w2 + b2
    assert out.shape == (batch, seq, d_model)
    assert jnp.allclose(out, ref, atol=1e-5, rtol=1e-5), "f32 mismatch vs reference"

    # Exercise the bf16 (scratch-accumulator) path as well, loose tolerance.
    ffn_bf16 = PositionwiseFeedForwardTPU(
        w1.astype(jnp.bfloat16), b1.astype(jnp.bfloat16),
        w2.astype(jnp.bfloat16), b2.astype(jnp.bfloat16))
    out_bf16 = jax.block_until_ready(ffn_bf16(x.astype(jnp.bfloat16)))
    assert out_bf16.shape == (batch, seq, d_model)
    assert jnp.allclose(out_bf16.astype(jnp.float32), ref, atol=5e-2, rtol=5e-2), \
        "bf16 mismatch vs reference"

    print("KERNEL_OK")
</pallas_src>

<mosaic_0001>
module attributes {stable_mosaic.version = 11 : i64} {
  func.func @ffn_kernel_f32(%arg0: i32, %arg1: i32, %arg2: memref<8x128xf32, #tpu.memory_space<vmem>>, %arg3: memref<128x128xf32, #tpu.memory_space<vmem>>, %arg4: memref<1x128xf32, #tpu.memory_space<vmem>>, %arg5: memref<128x128xf32, #tpu.memory_space<vmem>>, %arg6: memref<1x128xf32, #tpu.memory_space<vmem>>, %arg7: memref<8x128xf32, #tpu.memory_space<vmem>>) attributes {dimension_semantics = [#tpu.dimension_semantics<parallel>, #tpu.dimension_semantics<arbitrary>], iteration_bounds = array<i64: 2, 1>, scalar_prefetch = 0 : i64, scratch_operands = 0 : i64, tpu.core_type = #tpu.core_type<tc>, window_params = [{transform_indices = @transform_0, window_bounds = array<i64: 8, 128>}, {transform_indices = @transform_1, window_bounds = array<i64: 128, 128>}, {transform_indices = @transform_2, window_bounds = array<i64: 1, 128>}, {transform_indices = @transform_3, window_bounds = array<i64: 128, 128>}, {pipeline_mode = #tpu.pipeline_mode<synchronous>, transform_indices = @transform_4, window_bounds = array<i64: 1, 128>}, {transform_indices = @transform_5, window_bounds = array<i64: 8, 128>}]} {
    %c0_i32 = arith.constant 0 : i32
    %0 = arith.cmpi eq, %arg1, %c0_i32 : i32
    %1 = arith.extui %0 : i1 to i32
    %c0_i32_0 = arith.constant 0 : i32
    %2 = arith.cmpi ne, %1, %c0_i32_0 : i32
    scf.if %2 {
      %c0_14 = arith.constant 0 : index
      %c0_15 = arith.constant 0 : index
      %16 = vector.load %arg6[%c0_14, %c0_15] : memref<1x128xf32, #tpu.memory_space<vmem>>, vector<1x128xf32>
      %17 = vector.shape_cast %16 : vector<1x128xf32> to vector<1x128xf32>
      %18 = vector.broadcast %17 : vector<1x128xf32> to vector<8x128xf32>
      %c0_16 = arith.constant 0 : index
      %c0_17 = arith.constant 0 : index
      %19 = vector.load %arg7[%c0_16, %c0_17] : memref<8x128xf32, #tpu.memory_space<vmem>>, vector<8x128xf32>
      tpu.vector_store %arg7[%c0_16, %c0_17], %18 {strides = array<i32>} : memref<8x128xf32, #tpu.memory_space<vmem>>, vector<8x128xf32>,
    } else {
    }
    %c0 = arith.constant 0 : index
    %c0_1 = arith.constant 0 : index
    %3 = vector.load %arg2[%c0, %c0_1] : memref<8x128xf32, #tpu.memory_space<vmem>>, vector<8x128xf32>
    %c0_2 = arith.constant 0 : index
    %c0_3 = arith.constant 0 : index
    %4 = vector.load %arg3[%c0_2, %c0_3] : memref<128x128xf32, #tpu.memory_space<vmem>>, vector<128x128xf32>
    %cst = arith.constant dense<0.000000e+00> : vector<8x128xf32>
    %5 = tpu.matmul %3, %4, %cst {dimension_numbers = #tpu.dot_dimension_numbers<[1], [0], [0], [1], [0, 0, 1, 1], [], []>} : vector<8x128xf32>, vector<128x128xf32>, vector<8x128xf32> -> vector<8x128xf32>
    %c0_4 = arith.constant 0 : index
    %c0_5 = arith.constant 0 : index
    %6 = vector.load %arg4[%c0_4, %c0_5] : memref<1x128xf32, #tpu.memory_space<vmem>>, vector<1x128xf32>
    %7 = vector.broadcast %6 : vector<1x128xf32> to vector<8x128xf32>
    %8 = arith.addf %5, %7 : vector<8x128xf32>
    %cst_6 = arith.constant 0.000000e+00 : f32
    %9 = vector.broadcast %cst_6 : f32 to vector<8x128xf32>
    %10 = arith.maximumf %8, %9 : vector<8x128xf32>
    %c0_7 = arith.constant 0 : index
    %c0_8 = arith.constant 0 : index
    %11 = vector.load %arg7[%c0_7, %c0_8] : memref<8x128xf32, #tpu.memory_space<vmem>>, vector<8x128xf32>
    %c0_9 = arith.constant 0 : index
    %c0_10 = arith.constant 0 : index
    %12 = vector.load %arg5[%c0_9, %c0_10] : memref<128x128xf32, #tpu.memory_space<vmem>>, vector<128x128xf32>
    %cst_11 = arith.constant dense<0.000000e+00> : vector<8x128xf32>
    %13 = tpu.matmul %10, %12, %cst_11 {dimension_numbers = #tpu.dot_dimension_numbers<[1], [0], [0], [1], [0, 0, 1, 1], [], []>} : vector<8x128xf32>, vector<128x128xf32>, vector<8x128xf32> -> vector<8x128xf32>
    %14 = arith.addf %11, %13 : vector<8x128xf32>
    %c0_12 = arith.constant 0 : index
    %c0_13 = arith.constant 0 : index
    %15 = vector.load %arg7[%c0_12, %c0_13] : memref<8x128xf32, #tpu.memory_space<vmem>>, vector<8x128xf32>
    tpu.vector_store %arg7[%c0_12, %c0_13], %14 {strides = array<i32>} : memref<8x128xf32, #tpu.memory_space<vmem>>, vector<8x128xf32>,
    return
  }
  func.func @transform_0(%arg0: i32, %arg1: i32) -> (i32, i32) {
    %c0_i32 = arith.constant 0 : i32
    %c0_i32_0 = arith.constant 0 : i32
    return %arg0, %c0_i32 : i32, i32
  }
  func.func @transform_1(%arg0: i32, %arg1: i32) -> (i32, i32) {
    %c0_i32 = arith.constant 0 : i32
    %c0_i32_0 = arith.constant 0 : i32
    return %c0_i32, %arg1 : i32, i32
  }
  func.func @transform_2(%arg0: i32, %arg1: i32) -> (i32, i32) {
    %c0_i32 = arith.constant 0 : i32
    %c0_i32_0 = arith.constant 0 : i32
    return %c0_i32, %arg1 : i32, i32
  }
  func.func @transform_3(%arg0: i32, %arg1: i32) -> (i32, i32) {
    %c0_i32 = arith.constant 0 : i32
    %c0_i32_0 = arith.constant 0 : i32
    return %arg1, %c0_i32 : i32, i32
  }
  func.func @transform_4(%arg0: i32, %arg1: i32) -> (i32, i32) {
    %c0_i32 = arith.constant 0 : i32
    %c0_i32_0 = arith.constant 0 : i32
    %c0_i32_1 = arith.constant 0 : i32
    return %c0_i32, %c0_i32_0 : i32, i32
  }
  func.func @transform_5(%arg0: i32, %arg1: i32) -> (i32, i32) {
    %c0_i32 = arith.constant 0 : i32
    %c0_i32_0 = arith.constant 0 : i32
    return %arg0, %c0_i32 : i32, i32
  }
}

</mosaic_0001>

<llo_original>
// kernel: _ffn_forward.1
$region0: #{_ffn_forward.1}
  #allocation0 [shape = 'u32[]', space=smem, size = 0x4, offset = 0x4, fixed_abs, tag = 'smem constant byte address 0x4 - core index']
  #allocation1 [shape = 'u32[144,128]{1,0:T(1,128)}', space=vmem, size = 0x12000, scoped, tag = 'internal scratch']
  %s0 = inlined_call_operand.vmem [shape: f32[16,128], index: 0, kind: input, shape index: {}]
  %s1 = inlined_call_operand.hbm [shape: f32[128,128], index: 1, kind: input, shape index: {}]
  %s2 = inlined_call_operand.vmem [shape: f32[1,128], index: 2, kind: input, shape index: {}]
  %s3 = inlined_call_operand.hbm [shape: f32[128,128], index: 3, kind: input, shape index: {}]
  %s4 = inlined_call_operand.vmem [shape: f32[1,128], index: 4, kind: input, shape index: {}]
  %s5 = inlined_call_operand.vmem [shape: f32[16,128], index: 5, kind: output, shape index: {}]
  %s6 = sld [smem:[#allocation0]]
  $region65: #{_ffn_forward.1} parent=0
    _
  %s8 = ssub.s32 1, %s6
  %s9 = scalar_select 0, %s8, %s6
  $region1: #{_ffn_forward.1} parent=0
    #allocation2 [shape = 'u8[65536]{0}', space=vmem, size = 0x10000, scoped, tag = 'input window, operand 1, single buffered']
    #allocation3 [shape = 's32[2]{0}', space=sflag, size = 0x8, scoped, tag = 'scoped memory for _ffn_forward.1']
    #allocation4 [shape = 'u8[65536]{0}', space=vmem, size = 0x10000, scoped, tag = 'input window, operand 3, single buffered']
    #allocation5 [shape = 's32[1]{0}', space=sflag, size = 0x4, scoped, tag = 'scoped memory for _ffn_forward.1']
    %10 = vsyncpa [#allocation3], 0
    %11 = vsyncpa [#allocation5], 0
    loop: start=0, step=1, limit=4
    $region2: #{_ffn_forward.1} parent=1 // loop_pre_header
      _
    $region3: #{_ffn_forward.1} parent=1 // loop_header
      %s13 = sphi 0, %s17
      %p14 = scmp.ge.s32.totalorder %s13, 4
      %s20 = sphi 0, %s32
      %s21 = sphi 0, %s28
      %s22 = sphi 0, %s20
      %s23 = sphi 0, %s21
      %s24 = sphi 0, %s22
      %s25 = sphi 0, %s23
      %s35 = sphi 0, %s37
      %s38 = sphi 0, %s35
      %s39 = sphi 0, %s38
      %s55 = sphi 0, %s39
      %s61 = sphi 0, %s63
      %s64 = sphi 0, %s61
      %s65 = sphi 0, %s64
      %s81 = sphi 0, %s65
      %s87 = sphi 0, %s89
      %s90 = sphi 0, %s87
      %s91 = sphi 0, %s90
      %s107 = sphi 0, %s91
      %s113 = sphi 0, %s115
      %s116 = sphi 0, %s113
      %s117 = sphi 0, %s116
      %s133 = sphi 0, %s117
      %s137 = sphi 0, %s137
      %s139 = sphi 0, %s137
      %s140 = sphi 0, %s139
      %s154 = sphi 0, %s140
      %s160 = sphi 0, %s162
      %s163 = sphi 0, %s160
      %s164 = sphi 0, %s163
      %s180 = sphi 0, %s164
    $region4: #{_ffn_forward.1} parent=1 // loop_header_branch
      %16 = sbr.rel (%p14) target = $region8
    $region5: #{_ffn_forward.1} parent=1 // loop_body
      %s18 = ssub.s32 %s13, 1
      %s19 = ssub.s32 %s13, 2
      %s26 = sadd.s32 1, %s21
      %p27 = scmp.ge.s32.totalorder %s26, 1
      %s28 = scalar_select %p27, 0, %s26
      %s29 = sadd.s32 1, %s20
      %s30 = scalar_select %p27, %s29, %s20
      %p31 = scmp.ge.s32.totalorder %s30, 2
      %s32 = scalar_select %p31, 0, %s30
      %s33 = ssub.s32 %s20, %s32
      %p34 = scmp.eq.s32.totalorder %s33, 0
      %s36 = sadd.s32 %s35, 1
      %s37 = scalar_select %p34, %s35, %s36
      %p40 = pneg %p34
      %p41 = scmp.eq.s32.totalorder %s13, 1
      %p42 = por %p40, %p41
      %p43 = scmp.ne.s32.totalorder %s35, %s38
      %p44 = scmp.eq.s32.totalorder %s13, 0
      %p45 = por %p43, %p44
      %p46 = scmp.ne.s32.totalorder %s35, %s38
      %p47 = scmp.eq.s32.totalorder %s18, 1
      %p48 = por %p46, %p47
      %p49 = scmp.ne.s32.totalorder %s38, %s39
      %p50 = scmp.eq.s32.totalorder %s18, 0
      %p51 = por %p49, %p50
      %p52 = scmp.ne.s32.totalorder %s38, %s39
      %p53 = scmp.eq.s32.totalorder %s19, 1
      %p54 = por %p52, %p53
      %p56 = scmp.ne.s32.totalorder %s39, %s55
      %p57 = scmp.eq.s32.totalorder %s19, 0
      %p58 = por %p56, %p57
      %s59 = ssub.s32 %s21, %s28
      %p60 = scmp.eq.s32.totalorder %s59, 0
      %s62 = sadd.s32 %s61, 1
      %s63 = scalar_select %p60, %s61, %s62
      %p66 = pneg %p60
      %p67 = scmp.eq.s32.totalorder %s13, 1
      %p68 = por %p66, %p67
      %p69 = scmp.ne.s32.totalorder %s61, %s64
      %p70 = scmp.eq.s32.totalorder %s13, 0
      %p71 = por %p69, %p70
      %p72 = scmp.ne.s32.totalorder %s61, %s64
      %p73 = scmp.eq.s32.totalorder %s18, 1
      %p74 = por %p72, %p73
      %p75 = scmp.ne.s32.totalorder %s64, %s65
      %p76 = scmp.eq.s32.totalorder %s18, 0
      %p77 = por %p75, %p76
      %p78 = scmp.ne.s32.totalorder %s64, %s65
      %p79 = scmp.eq.s32.totalorder %s19, 1
      %p80 = por %p78, %p79
      %p82 = scmp.ne.s32.totalorder %s65, %s81
      %p83 = scmp.eq.s32.totalorder %s19, 0
      %p84 = por %p82, %p83
      %s85 = ssub.s32 %s21, %s28
      %p86 = scmp.eq.s32.totalorder %s85, 0
      %s88 = sadd.s32 %s87, 1
      %s89 = scalar_select %p86, %s87, %s88
      %p92 = pneg %p86
      %p93 = scmp.eq.s32.totalorder %s13, 1
      %p94 = por %p92, %p93
      %p95 = scmp.ne.s32.totalorder %s87, %s90
      %p96 = scmp.eq.s32.totalorder %s13, 0
      %p97 = por %p95, %p96
      %p98 = scmp.ne.s32.totalorder %s87, %s90
      %p99 = scmp.eq.s32.totalorder %s18, 1
      %p100 = por %p98, %p99
      %p101 = scmp.ne.s32.totalorder %s90, %s91
      %p102 = scmp.eq.s32.totalorder %s18, 0
      %p103 = por %p101, %p102
      %p104 = scmp.ne.s32.totalorder %s90, %s91
      %p105 = scmp.eq.s32.totalorder %s19, 1
      %p106 = por %p104, %p105
      %p108 = scmp.ne.s32.totalorder %s91, %s107
      %p109 = scmp.eq.s32.totalorder %s19, 0
      %p110 = por %p108, %p109
      %s111 = ssub.s32 %s21, %s28
      %p112 = scmp.eq.s32.totalorder %s111, 0
      %s114 = sadd.s32 %s113, 1
      %s115 = scalar_select %p112, %s113, %s114
      %p118 = pneg %p112
      %p119 = scmp.eq.s32.totalorder %s13, 1
      %p120 = por %p118, %p119
      %p121 = scmp.ne.s32.totalorder %s113, %s116
      %p122 = scmp.eq.s32.totalorder %s13, 0
      %p123 = por %p121, %p122
      %p124 = scmp.ne.s32.totalorder %s113, %s116
      %p125 = scmp.eq.s32.totalorder %s18, 1
      %p126 = por %p124, %p125
      %p127 = scmp.ne.s32.totalorder %s116, %s117
      %p128 = scmp.eq.s32.totalorder %s18, 0
      %p129 = por %p127, %p128
      %p130 = scmp.ne.s32.totalorder %s116, %s117
      %p131 = scmp.eq.s32.totalorder %s19, 1
      %p132 = por %p130, %p131
      %p134 = scmp.ne.s32.totalorder %s117, %s133
      %p135 = scmp.eq.s32.totalorder %s19, 0
      %p136 = por %p134, %p135
      %s138 = sadd.s32 %s137, 1
      %p141 = scmp.eq.s32.totalorder %s13, 1
      %p142 = scmp.ne.s32.totalorder %s137, %s139
      %p143 = scmp.eq.s32.totalorder %s13, 0
      %p144 = por %p142, %p143
      %p145 = scmp.ne.s32.totalorder %s137, %s139
      %p146 = scmp.eq.s32.totalorder %s18, 1
      %p147 = por %p145, %p146
      %p148 = scmp.ne.s32.totalorder %s139, %s140
      %p149 = scmp.eq.s32.totalorder %s18, 0
      %p150 = por %p148, %p149
      %p151 = scmp.ne.s32.totalorder %s139, %s140
      %p152 = scmp.eq.s32.totalorder %s19, 1
      %p153 = por %p151, %p152
      %p155 = scmp.ne.s32.totalorder %s140, %s154
      %p156 = scmp.eq.s32.totalorder %s19, 0
      %p157 = por %p155, %p156
      %s158 = ssub.s32 %s20, %s32
      %p159 = scmp.eq.s32.totalorder %s158, 0
      %s161 = sadd.s32 %s160, 1
      %s162 = scalar_select %p159, %s160, %s161
      %p165 = pneg %p159
      %p166 = scmp.eq.s32.totalorder %s13, 1
      %p167 = por %p165, %p166
      %p168 = scmp.ne.s32.totalorder %s160, %s163
      %p169 = scmp.eq.s32.totalorder %s13, 0
      %p170 = por %p168, %p169
      %p171 = scmp.ne.s32.totalorder %s160, %s163
      %p172 = scmp.eq.s32.totalorder %s18, 1
      %p173 = por %p171, %p172
      %p174 = scmp.ne.s32.totalorder %s163, %s164
      %p175 = scmp.eq.s32.totalorder %s18, 0
      %p176 = por %p174, %p175
      %p177 = scmp.ne.s32.totalorder %s163, %s164
      %p178 = scmp.eq.s32.totalorder %s19, 1
      %p179 = por %p177, %p178
      %p181 = scmp.ne.s32.totalorder %s164, %s180
      %p182 = scmp.eq.s32.totalorder %s19, 0
      %p183 = por %p181, %p182
      %p184 = scmp.le.s32.totalorder 1, %s13
      %p185 = scmp.lt.s32.totalorder %s13, 3
      %p186 = pnand %p184, %p185
      %p187 = pneg %p186
      // Predicated region
      $region9: #{_ffn_forward.1} parent=5 // pred_check
        _
      $region10: #{_ffn_forward.1} parent=5 // pred_check_branch
        %189 = sbr.rel (%p186) target = $region12
      $region11: #{_ffn_forward.1} parent=5 // pred_region
        %s190 = ssub.s32 %s13, 1
        // Predicated region
        $region13: #{_ffn_forward.1} parent=11 // pred_check
          %p191 = pneg %p77
        $region14: #{_ffn_forward.1} parent=11 // pred_check_branch
          %193 = sbr.rel (%p191) target = $region16
        $region15: #{_ffn_forward.1} parent=11 // pred_region
          %s195 = ssub.s32 2048, 2048
          %196 = vsyncadd [#allocation3], %s195
          %s197 = smul.addr %s23, 128
          %s198 = scalar_lea.hbm %s1, %s197
          %s199 = sshll.u32 [#allocation2], 4
          %s200 = int_to_ptr.vmem [resolvable:$true] %s199
          %205 = dma.hbm_to_vmem [thread:$0]  %s198, 2048, %s200, [#allocation3], 128, 128, 8
        $region16: #{_ffn_forward.1} parent=11 // pred_fallthru
          _
        // Predicated region
        $region17: #{_ffn_forward.1} parent=11 // pred_check
          %p206 = pneg %p103
        $region18: #{_ffn_forward.1} parent=11 // pred_check_branch
          %208 = sbr.rel (%p206) target = $region20
        $region19: #{_ffn_forward.1} parent=11 // pred_region
          %p209 = scmp.lt.s32.totalorder %s23, 0
          %s210 = scalar_select %p209, %s23, 0
          %s211 = scalar_lea.vmem %s2, %s210
        $region20: #{_ffn_forward.1} parent=11 // pred_fallthru
          _
        // Predicated region
        $region21: #{_ffn_forward.1} parent=11 // pred_check
          %p212 = pneg %p129
        $region22: #{_ffn_forward.1} parent=11 // pred_check_branch
          %214 = sbr.rel (%p212) target = $region24
        $region23: #{_ffn_forward.1} parent=11 // pred_region
          %s215 = smul.u32 16, %s23
          %s217 = ssub.s32 2048, 2048
          %218 = vsyncadd [#allocation5], %s217
          %s219 = smul.addr %s215, 128
          %s220 = scalar_lea.hbm %s3, %s219
          %s221 = sshll.u32 [#allocation4], 4
          %s222 = int_to_ptr.vmem [resolvable:$true] %s221
          %227 = dma.hbm_to_vmem [thread:$0]  %s220, 2048, %s222, [#allocation5], 128, 128, 8
        $region24: #{_ffn_forward.1} parent=11 // pred_fallthru
          _
        // Predicated region
        $region25: #{_ffn_forward.1} parent=11 // pred_check
          %p228 = pneg %p150
        $region26: #{_ffn_forward.1} parent=11 // pred_check_branch
          %230 = sbr.rel (%p228) target = $region28
        $region27: #{_ffn_forward.1} parent=11 // pred_region
          _
        $region28: #{_ffn_forward.1} parent=11 // pred_fallthru
          _
      $region12: #{_ffn_forward.1} parent=5 // pred_fallthru
        _
      %p231 = scmp.lt.s32.totalorder %s13, 2
      // Predicated region
      $region29: #{_ffn_forward.1} parent=5 // pred_check
        %p232 = pneg %p231
      $region30: #{_ffn_forward.1} parent=5 // pred_check_branch
        %234 = sbr.rel (%p232) target = $region32
      $region31: #{_ffn_forward.1} parent=5 // pred_region
        // Predicated region
        $region33: #{_ffn_forward.1} parent=31 // pred_check
          %p235 = pneg %p45
        $region34: #{_ffn_forward.1} parent=31 // pred_check_branch
          %237 = sbr.rel (%p235) target = $region36
        $region35: #{_ffn_forward.1} parent=31 // pred_region
          %p238 = scmp.lt.s32.totalorder %s20, 1
          %s239 = scalar_select %p238, %s20, 1
          %s240 = smul.addr %s239, 8
          %s241 = scalar_lea.vmem %s0, %s240
        $region36: #{_ffn_forward.1} parent=31 // pred_fallthru
          _
      $region32: #{_ffn_forward.1} parent=5 // pred_fallthru
        _
      %p242 = scmp.le.s32.totalorder 1, %s13
      %p243 = scmp.lt.s32.totalorder %s13, 3
      %p244 = pnand %p242, %p243
      %p245 = pneg %p244
      // Predicated region
      $region37: #{_ffn_forward.1} parent=5 // pred_check
        _
      $region38: #{_ffn_forward.1} parent=5 // pred_check_branch
        %247 = sbr.rel (%p244) target = $region40
      $region39: #{_ffn_forward.1} parent=5 // pred_region
        %s248 = ssub.s32 %s13, 1
        // Predicated region
        $region41: #{_ffn_forward.1} parent=39 // pred_check
          %p249 = pneg %p77
        $region42: #{_ffn_forward.1} parent=39 // pred_check_branch
          %251 = sbr.rel (%p249) target = $region44
        $region43: #{_ffn_forward.1} parent=39 // pred_region
          %252 = dma.done [#allocation3], 2048
        $region44: #{_ffn_forward.1} parent=39 // pred_fallthru
          _
        // Predicated region
        $region45: #{_ffn_forward.1} parent=39 // pred_check
          %p253 = pneg %p129
        $region46: #{_ffn_forward.1} parent=39 // pred_check_branch
          %255 = sbr.rel (%p253) target = $region48
        $region47: #{_ffn_forward.1} parent=39 // pred_region
          %256 = dma.done [#allocation5], 2048
        $region48: #{_ffn_forward.1} parent=39 // pred_fallthru
          _
        %p257 = scmp.lt.s32.totalorder %s22, 1
        %s258 = scalar_select %p257, %s22, 1
        %s259 = smul.addr %s258, 8
        %s260 = scalar_lea.vmem %s0, %s259
        %p261 = pneg %p51
        %p262 = pneg %p48
        %p263 = pneg %p77
        %p264 = pneg %p74
        %p265 = scmp.lt.s32.totalorder %s23, 0
        %s266 = scalar_select %p265, %s23, 0
        %s267 = scalar_lea.vmem %s2, %s266
        %p268 = pneg %p103
        %p269 = pneg %p100
        %p270 = pneg %p129
        %p271 = pneg %p126
        %p272 = pneg %p150
        %p273 = pneg %p147
        %p274 = pneg %p176
        %p275 = pneg %p173
        %p276 = scmp.lt.s32.totalorder %s22, 1
        %s277 = scalar_select %p276, %s22, 1
        %s278 = smul.addr %s277, 8
        %s279 = scalar_lea.vmem %s5, %s278
        %p280 = scmp.lt.s32.totalorder %s22, 1
        %s281 = scalar_select %p280, %s22, 1
        %s282 = smul.addr %s281, 8
        %s283 = scalar_lea.vmem %s0, %s282
        %p284 = scmp.lt.s32.totalorder %s23, 0
        %s285 = scalar_select %p284, %s23, 0
        %s286 = scalar_lea.vmem %s2, %s285
        %s287 = smul.u32 16, %s23
        %p288 = scmp.lt.s32.totalorder %s22, 1
        %s289 = scalar_select %p288, %s22, 1
        %s290 = smul.addr %s289, 8
        %s291 = scalar_lea.vmem %s5, %s290
        %p292 = scmp.eq.s32.totalorder %s23, 0
        // Predicated region
        $region49: #{_ffn_forward.1} parent=39 // pred_check
          %p293 = pneg %p292
        $region50: #{_ffn_forward.1} parent=39 // pred_check_branch
          %295 = sbr.rel (%p293) target = $region52
        $region51: #{_ffn_forward.1} parent=39 // pred_region
          %v296 = vld [vmem:[%s4] sm:$0x1]
          %v298 = vlaneseq
          %v299 = vshrl.u32 %v298, 7
          %v300 = vsub.s32 0, %v299
          %v301 = vrot.slane %v296, %v300
          %303 = vst [vmem:[%s291] sm:$0xff] %v301
        $region52: #{_ffn_forward.1} parent=39 // pred_fallthru
          _
        %v304 = vld [vmem:[%s283] sm:$0xff]
        %v305 = vld [vmem:[#allocation2] sm:$0xff]
        %v306 = vld [vmem:[#allocation2 + $0x8] sm:$0xff]
        %v307 = vld [vmem:[#allocation2 + $0x10] sm:$0xff]
        %v308 = vld [vmem:[#allocation2 + $0x18] sm:$0xff]
        %v309 = vld [vmem:[#allocation2 + $0x20] sm:$0xff]
        %v310 = vld [vmem:[#allocation2 + $0x28] sm:$0xff]
        %v311 = vld [vmem:[#allocation2 + $0x30] sm:$0xff]
        %v312 = vld [vmem:[#allocation2 + $0x38] sm:$0xff]
        %v313 = vld [vmem:[#allocation2 + $0x40] sm:$0xff]
        %v314 = vld [vmem:[#allocation2 + $0x48] sm:$0xff]
        %v315 = vld [vmem:[#allocation2 + $0x50] sm:$0xff]
        %v316 = vld [vmem:[#allocation2 + $0x58] sm:$0xff]
        %v317 = vld [vmem:[#allocation2 + $0x60] sm:$0xff]
        %v318 = vld [vmem:[#allocation2 + $0x68] sm:$0xff]
        %v319 = vld [vmem:[#allocation2 + $0x70] sm:$0xff]
        %v320 = vld [vmem:[#allocation2 + $0x78] sm:$0xff]
        %v321 = vld [vmem:[%s286] sm:$0x1]
        %v323 = vlaneseq
        %v324 = vshrl.u32 %v323, 7
        %v325 = vsub.s32 0, %v324
        %v326 = vrot.slane %v321, %v325
        %328 = vmatprep.subr.mxu0 0.0
        %329 = vmatpush1.msra.mxu0 %v320
        %330 = vmatprep.subr.mxu0 0.0
        %331 = vmatpush1.msra.mxu0 %v319
        %332 = vmatprep.subr.mxu0 0.0
        %333 = vmatpush1.msra.mxu0 %v318
        %334 = vmatprep.subr.mxu0 0.0
        %335 = vmatpush1.msra.mxu0 %v317
        %336 = vmatprep.subr.mxu0 0.0
        %337 = vmatpush1.msra.mxu0 %v316
        %338 = vmatprep.subr.mxu0 0.0
        %339 = vmatpush1.msra.mxu0 %v315
        %340 = vmatprep.subr.mxu0 0.0
        %341 = vmatpush1.msra.mxu0 %v314
        %342 = vmatprep.subr.mxu0 0.0
        %343 = vmatpush1.msra.mxu0 %v313
        %344 = vmatprep.subr.mxu0 0.0
        %345 = vmatpush1.msra.mxu0 %v312
        %346 = vmatprep.subr.mxu0 0.0
        %347 = vmatpush1.msra.mxu0 %v311
        %348 = vmatprep.subr.mxu0 0.0
        %349 = vmatpush1.msra.mxu0 %v310
        %350 = vmatprep.subr.mxu0 0.0
        %351 = vmatpush1.msra.mxu0 %v309
        %352 = vmatprep.subr.mxu0 0.0
        %353 = vmatpush1.msra.mxu0 %v308
        %354 = vmatprep.subr.mxu0 0.0
        %355 = vmatpush1.msra.mxu0 %v307
        %356 = vmatprep.subr.mxu0 0.0
        %357 = vmatpush1.msra.mxu0 %v306
        %358 = vmatprep.subr.mxu0 0.0
        %359 = vmatpush1.msra.mxu0 %v305
        %360 = vmatprep.subr.mxu0 0.0
        %361 = vmatpush2.msra.mxu0 0.0
        %362 = vmatprep.subr.mxu0 0.0
        %363 = vmatpush2.msra.mxu0 0.0
        %364 = vmatprep.subr.mxu0 0.0
        %365 = vmatpush2.msra.mxu0 0.0
        %366 = vmatprep.subr.mxu0 0.0
        %367 = vmatpush2.msra.mxu0 0.0
        %368 = vmatprep.subr.mxu0 0.0
        %369 = vmatpush2.msra.mxu0 0.0
        %370 = vmatprep.subr.mxu0 0.0
        %371 = vmatpush2.msra.mxu0 0.0
        %372 = vmatprep.subr.mxu0 0.0
        %373 = vmatpush2.msra.mxu0 0.0
        %374 = vmatprep.subr.mxu0 0.0
        %375 = vmatpush2.msra.mxu0 0.0
        %376 = vmatprep.subr.mxu0 0.0
        %377 = vmatpush2.msra.mxu0 0.0
        %378 = vmatprep.subr.mxu0 0.0
        %379 = vmatpush2.msra.mxu0 0.0
        %380 = vmatprep.subr.mxu0 0.0
        %381 = vmatpush2.msra.mxu0 0.0
        %382 = vmatprep.subr.mxu0 0.0
        %383 = vmatpush2.msra.mxu0 0.0
        %384 = vmatprep.subr.mxu0 0.0
        %385 = vmatpush2.msra.mxu0 0.0
        %386 = vmatprep.subr.mxu0 0.0
        %387 = vmatpush2.msra.mxu0 0.0
        %388 = vmatprep.subr.mxu0 0.0
        %389 = vmatpush2.msra.mxu0 0.0
        %390 = vmatprep.subr.mxu0 0.0
        %391 = vmatpush2.msra.mxu0 0.0
        %392 = vmatprep.mubr.f32.mxu0 0.0
        %393 = vmatmul.mubr.f32.gmra.mxu0 %v304
        %v394 = vpop.f32.mrf.mxu0
        %v395 = vadd.f32 %v326, %v394
        %v396 = vpop.f32.mrf.mxu0
        %397 = vdwg.mxu0
        %v398 = vmax.f32 %v395, 0.0
        %v399 = vld [vmem:[%s291] sm:$0xff]
        %v400 = vld [vmem:[#allocation4] sm:$0xff]
        %v401 = vld [vmem:[#allocation4 + $0x8] sm:$0xff]
        %v402 = vld [vmem:[#allocation4 + $0x10] sm:$0xff]
        %v403 = vld [vmem:[#allocation4 + $0x18] sm:$0xff]
        %v404 = vld [vmem:[#allocation4 + $0x20] sm:$0xff]
        %v405 = vld [vmem:[#allocation4 + $0x28] sm:$0xff]
        %v406 = vld [vmem:[#allocation4 + $0x30] sm:$0xff]
        %v407 = vld [vmem:[#allocation4 + $0x38] sm:$0xff]
        %v408 = vld [vmem:[#allocation4 + $0x40] sm:$0xff]
        %v409 = vld [vmem:[#allocation4 + $0x48] sm:$0xff]
        %v410 = vld [vmem:[#allocation4 + $0x50] sm:$0xff]
        %v411 = vld [vmem:[#allocation4 + $0x58] sm:$0xff]
        %v412 = vld [vmem:[#allocation4 + $0x60] sm:$0xff]
        %v413 = vld [vmem:[#allocation4 + $0x68] sm:$0xff]
        %v414 = vld [vmem:[#allocation4 + $0x70] sm:$0xff]
        %v415 = vld [vmem:[#allocation4 + $0x78] sm:$0xff]
        %416 = vmatprep.subr.mxu0 0.0
        %417 = vmatpush1.msra.mxu0 %v415
        %418 = vmatprep.subr.mxu0 0.0
        %419 = vmatpush1.msra.mxu0 %v414
        %420 = vmatprep.subr.mxu0 0.0
        %421 = vmatpush1.msra.mxu0 %v413
        %422 = vmatprep.subr.mxu0 0.0
        %423 = vmatpush1.msra.mxu0 %v412
        %424 = vmatprep.subr.mxu0 0.0
        %425 = vmatpush1.msra.mxu0 %v411
        %426 = vmatprep.subr.mxu0 0.0
        %427 = vmatpush1.msra.mxu0 %v410
        %428 = vmatprep.subr.mxu0 0.0
        %429 = vmatpush1.msra.mxu0 %v409
        %430 = vmatprep.subr.mxu0 0.0
        %431 = vmatpush1.msra.mxu0 %v408
        %432 = vmatprep.subr.mxu0 0.0
        %433 = vmatpush1.msra.mxu0 %v407
        %434 = vmatprep.subr.mxu0 0.0
        %435 = vmatpush1.msra.mxu0 %v406
        %436 = vmatprep.subr.mxu0 0.0
        %437 = vmatpush1.msra.mxu0 %v405
        %438 = vmatprep.subr.mxu0 0.0
        %439 = vmatpush1.msra.mxu0 %v404
        %440 = vmatprep.subr.mxu0 0.0
        %441 = vmatpush1.msra.mxu0 %v403
        %442 = vmatprep.subr.mxu0 0.0
        %443 = vmatpush1.msra.mxu0 %v402
        %444 = vmatprep.subr.mxu0 0.0
        %445 = vmatpush1.msra.mxu0 %v401
        %446 = vmatprep.subr.mxu0 0.0
        %447 = vmatpush1.msra.mxu0 %v400
        %448 = vmatprep.subr.mxu0 0.0
        %449 = vmatpush2.msra.mxu0 0.0
        %450 = vmatprep.subr.mxu0 0.0
        %451 = vmatpush2.msra.mxu0 0.0
        %452 = vmatprep.subr.mxu0 0.0
        %453 = vmatpush2.msra.mxu0 0.0
        %454 = vmatprep.subr.mxu0 0.0
        %455 = vmatpush2.msra.mxu0 0.0
        %456 = vmatprep.subr.mxu0 0.0
        %457 = vmatpush2.msra.mxu0 0.0
        %458 = vmatprep.subr.mxu0 0.0
        %459 = vmatpush2.msra.mxu0 0.0
        %460 = vmatprep.subr.mxu0 0.0
        %461 = vmatpush2.msra.mxu0 0.0
        %462 = vmatprep.subr.mxu0 0.0
        %463 = vmatpush2.msra.mxu0 0.0
        %464 = vmatprep.subr.mxu0 0.0
        %465 = vmatpush2.msra.mxu0 0.0
        %466 = vmatprep.subr.mxu0 0.0
        %467 = vmatpush2.msra.mxu0 0.0
        %468 = vmatprep.subr.mxu0 0.0
        %469 = vmatpush2.msra.mxu0 0.0
        %470 = vmatprep.subr.mxu0 0.0
        %471 = vmatpush2.msra.mxu0 0.0
        %472 = vmatprep.subr.mxu0 0.0
        %473 = vmatpush2.msra.mxu0 0.0
        %474 = vmatprep.subr.mxu0 0.0
        %475 = vmatpush2.msra.mxu0 0.0
        %476 = vmatprep.subr.mxu0 0.0
        %477 = vmatpush2.msra.mxu0 0.0
        %478 = vmatprep.subr.mxu0 0.0
        %479 = vmatpush2.msra.mxu0 0.0
        %480 = vmatprep.mubr.f32.mxu0 0.0
        %481 = vmatmul.mubr.f32.gmra.mxu0 %v398
        %v482 = vpop.f32.mrf.mxu0
        %v483 = vadd.f32 0.0, %v482
        %v484 = vpop.f32.mrf.mxu0
        %485 = vdwg.mxu0
        %v486 = vadd.f32 %v399, %v483
        %487 = vst [vmem:[%s291] sm:$0xff] %v486
        %p488 = scmp.lt.s32.totalorder %s22, 1
        %s489 = scalar_select %p488, %s22, 1
        %s490 = smul.addr %s489, 8
        %s491 = scalar_lea.vmem %s5, %s490
        // Predicated region
        $region53: #{_ffn_forward.1} parent=39 // pred_check
          %p492 = pneg %p173
        $region54: #{_ffn_forward.1} parent=39 // pred_check_branch
          %494 = sbr.rel (%p492) target = $region56
        $region55: #{_ffn_forward.1} parent=39 // pred_region
          _
        $region56: #{_ffn_forward.1} parent=39 // pred_fallthru
          _
      $region40: #{_ffn_forward.1} parent=5 // pred_fallthru
        _
      %p495 = scmp.le.s32.totalorder 2, %s13
      // Predicated region
      $region57: #{_ffn_forward.1} parent=5 // pred_check
        %p496 = pneg %p495
      $region58: #{_ffn_forward.1} parent=5 // pred_check_branch
        %498 = sbr.rel (%p496) target = $region60
      $region59: #{_ffn_forward.1} parent=5 // pred_region
        %s499 = ssub.s32 %s13, 2
        // Predicated region
        $region61: #{_ffn_forward.1} parent=59 // pred_check
          %p500 = pneg %p179
        $region62: #{_ffn_forward.1} parent=59 // pred_check_branch
          %502 = sbr.rel (%p500) target = $region64
        $region63: #{_ffn_forward.1} parent=59 // pred_region
          %p503 = scmp.lt.s32.totalorder %s24, 1
          %s504 = scalar_select %p503, %s24, 1
          %s505 = smul.addr %s504, 8
          %s506 = scalar_lea.vmem %s5, %s505
        $region64: #{_ffn_forward.1} parent=59 // pred_fallthru
          _
      $region60: #{_ffn_forward.1} parent=5 // pred_fallthru
        _
    $region6: #{_ffn_forward.1} parent=1 // loop_footer
      %s17 = sadd.s32 1, %s13
    $region7: #{_ffn_forward.1} parent=1 // loop_footer_branch
      %12 = sbr.rel target = $region3
    $region8: #{_ffn_forward.1} parent=1 // loop_exit
      _
    %507 = vsyncpa [#allocation3], 1
    %s508 = scalar_lea.sflag [#allocation3], 1
    %509 = vsyncpa %s508, 1
    %510 = vsyncpa [#allocation5], 1

</llo_original>
